<compile_context>
chip_gen: v7x
topology: tpu7x:2x2x1
jax: 0.10.0
libtpu: 0.0.40
codegen_flags: <defaults>
</compile_context>

<pallas_src>
import functools
import math

import jax
import jax.numpy as jnp
from jax.experimental import pallas as pl
from jax.experimental.pallas import tpu as pltpu


def _lane_pad(x):
    return ((x + 127) // 128) * 128


def _decoder_kernel(*refs, nspk, n_feat, split_mask):
    # split_mask=True : refs = (mix, mask_0..mask_{nspk-1}, norm, w, out)
    #                   mask_s ref: (1, TK, N) lane-aligned per-speaker slab
    # split_mask=False: refs = (mix, mask_merged, norm, w, out)
    #                   mask ref  : (1, TK, nspk*N), sliced per speaker in-kernel
    if split_mask:
        mix_ref = refs[0]
        mask_refs = refs[1:1 + nspk]
        norm_ref, w_ref, out_ref = refs[1 + nspk:4 + nspk]
    else:
        mix_ref, mask_ref, norm_ref, w_ref, out_ref = refs

    mix = mix_ref[0]                                   # (TK, N)   stream dtype
    w = w_ref[...]                                     # (N, L)    stream dtype
    norm = norm_ref[0]                                 # (TK, 1)   f32
    l_out = out_ref.shape[-1]

    # Hoist the norm lane-broadcast out of the speaker loop (no CSE of
    # broadcast_in_dim across the static unroll).
    norm_b = jnp.broadcast_to(norm, (norm.shape[0], l_out))          # (TK, L) f32

    for s in range(nspk):                              # static unroll; nspk is tiny
        if split_mask:
            mask_s = mask_refs[s][0]                                  # (TK, N)
        else:
            mask_s = mask_ref[0, :, s * n_feat:(s + 1) * n_feat]     # (TK, N)
        src = mix * mask_s                                           # masked source
        est = jnp.dot(src, w, preferred_element_type=jnp.float32)    # (TK, L) MXU/f32
        out_ref[0, s] = (est * norm_b).astype(out_ref.dtype)


def decoder_forward(mixture_w, est_mask, norm_coef, basis_signals_weight,
                    *, max_rows_per_step=None):
    """Pallas implementation of TasNet Decoder.forward.

    Args:
      mixture_w:            [B, K, N]       (streamed in its own dtype; pass bf16
                                             if the upstream producer emits bf16)
      est_mask:             [B, K, nspk, N] (native layout, never transposed/cast)
      norm_coef:            [B, K, 1]
      basis_signals_weight: [L, N]          (same layout as nn.Linear(N, L).weight)
      max_rows_per_step:    optional hard cap on the K-tile (testing / tuning).
    Returns:
      est_source: [B, nspk, K, L]
    """
    B, K, N = mixture_w.shape
    assert est_mask.shape[0] == B and est_mask.shape[1] == K and est_mask.shape[3] == N
    nspk = est_mask.shape[2]
    L, n_w = basis_signals_weight.shape
    assert n_w == N

    mix_dtype = jnp.dtype(mixture_w.dtype)
    mask_dtype = jnp.dtype(est_mask.dtype)
    stream_dtype = jnp.result_type(mix_dtype, mask_dtype)
    out_dtype = mix_dtype

    # ---- cheap / zero-copy glue (never touches the big tensors' bytes) -------
    mask_m = est_mask.reshape(B, K, nspk * N)                # zero-copy dim merge
    norm_f32 = norm_coef.astype(jnp.float32)                 # tiny
    w_t = jnp.transpose(basis_signals_weight).astype(stream_dtype)   # (N, L), tiny

    # Lane-aligned per-speaker DMA extraction only possible when N % 128 == 0;
    # otherwise slice the merged block inside the kernel.
    split_mask = (N % 128 == 0)

    # ---- TK sizing from a per-generation VMEM budget --------------------------
    min_item = min(mix_dtype.itemsize, mask_dtype.itemsize)
    sub = 8 if min_item >= 4 else 16

    # Keep >= ~8 grid steps (when possible) so megacore sharding has work.
    min_steps = 8
    k_tiles_wanted = max(1, -(-min_steps // B))
    tk_parallel = -(-K // k_tiles_wanted)
    tk_parallel = max(sub, (-(-tk_parallel // sub)) * sub)

    out_item = jnp.dtype(out_dtype).itemsize
    w_item = jnp.dtype(stream_dtype).itemsize
    lane_n = _lane_pad(N)
    lane_l = _lane_pad(L)
    # Per-K-row VMEM bytes (lane-padded, double-buffered blocks + f32 temporaries).
    per_row = (2 * lane_n * mix_dtype.itemsize             # mixture_w blocks
               + 2 * nspk * lane_n * mask_dtype.itemsize   # est_mask blocks
               + 2 * 128 * 4                                # norm_coef blocks
               + 2 * nspk * lane_l * out_item               # output blocks
               + 2 * lane_n * 4 + 2 * lane_l * 4)           # src / est temporaries
    const_bytes = (2 * ((-(-N // 8)) * 8) * lane_l * w_item  # resident weight bufs
                   + (2 << 20))                              # Mosaic internal scratch

    try:
        phys_vmem = int(pltpu.get_tpu_info().vmem_capacity_bytes)
    except Exception:
        phys_vmem = 64 * 1024 * 1024          # conservative floor (v7x per-TC)
    budget = (phys_vmem * 3) // 4             # ~48 MiB on v7x, ~96 MiB on v5e/v6e

    tk_budget = max(sub, (((budget - const_bytes) // per_row) // sub) * sub)
    tk = min(tk_budget, tk_parallel)
    if max_rows_per_step is not None:
        tk = min(tk, max(sub, (max_rows_per_step // sub) * sub))
    TK = K if tk >= K else tk                 # full-K block is legal for any K
    grid = (B, pl.cdiv(K, TK))

    vmem_limit = int(min(phys_vmem,
                         max(TK * per_row + const_bytes + (4 << 20), 16 << 20)))

    # ---- BlockSpecs ------------------------------------------------------------
    in_specs = [pl.BlockSpec((1, TK, N), lambda b, kt: (b, kt, 0))]   # mixture_w
    operands = [mixture_w]
    if split_mask:
        for s in range(nspk):
            # block index s along the merged last dim -> element offset s*N,
            # extracted by the DMA -> lane-aligned (TK, N) slab in VMEM.
            in_specs.append(pl.BlockSpec((1, TK, N),
                                         lambda b, kt, s=s: (b, kt, s)))
            operands.append(mask_m)
    else:
        in_specs.append(pl.BlockSpec((1, TK, nspk * N),
                                     lambda b, kt: (b, kt, 0)))
        operands.append(mask_m)
    in_specs.append(pl.BlockSpec((1, TK, 1), lambda b, kt: (b, kt, 0)))  # norm_coef
    in_specs.append(pl.BlockSpec((N, L), lambda b, kt: (0, 0)))          # weight.T
    operands += [norm_f32, w_t]

    out_spec = pl.BlockSpec((1, nspk, TK, L), lambda b, kt: (b, 0, kt, 0))

    # Advisory cost estimate (accurate now: no wrapper cast, no padded output).
    flops = int(2 * B * nspk * K * N * L + 2 * B * nspk * K * N + B * nspk * K * L)
    bytes_accessed = int(B * K * N * mix_dtype.itemsize
                         + B * K * nspk * N * mask_dtype.itemsize
                         + B * K * 4
                         + N * L * w_item
                         + B * nspk * K * L * out_item)
    cost = pl.CostEstimate(flops=flops, transcendentals=0,
                           bytes_accessed=bytes_accessed)

    return pl.pallas_call(
        functools.partial(_decoder_kernel, nspk=nspk, n_feat=N,
                          split_mask=split_mask),
        out_shape=jax.ShapeDtypeStruct((B, nspk, K, L), out_dtype),
        grid_spec=pltpu.PrefetchScalarGridSpec(
            num_scalar_prefetch=0,
            grid=grid,
            in_specs=in_specs,
            out_specs=out_spec,
        ),
        compiler_params=pltpu.CompilerParams(
            dimension_semantics=("parallel", "parallel"),
            vmem_limit_bytes=vmem_limit,
        ),
        cost_estimate=cost,
    )(*operands)


def decoder_reference(mixture_w, est_mask, norm_coef, basis_signals_weight):
    """Pure-JAX reference mirroring the PyTorch module."""
    source_w = mixture_w[:, :, None, :] * est_mask                   # [B, K, nspk, N]
    est_source = jnp.einsum("bksn,ln->bksl", source_w, basis_signals_weight)
    est_source = est_source * norm_coef[:, :, None, :]               # [B, K, nspk, L]
    return jnp.transpose(est_source, (0, 2, 1, 3))                   # [B, nspk, K, L]


if __name__ == "__main__":
    def make_inputs(key, B, K, N, L, nspk):
        k_mix, k_mask, k_norm, k_w = jax.random.split(key, 4)
        mixture_w = jax.random.normal(k_mix, (B, K, N), dtype=jnp.float32)
        # Masks come out of a softmax over speakers in the full TasNet model.
        est_mask = jax.nn.softmax(
            jax.random.normal(k_mask, (B, K, nspk, N), dtype=jnp.float32), axis=2)
        norm_coef = jax.random.uniform(k_norm, (B, K, 1), dtype=jnp.float32) + 0.5
        bound = 1.0 / math.sqrt(N)   # nn.Linear(N, L, bias=False) init range
        w = jax.random.uniform(k_w, (L, N), minval=-bound, maxval=bound,
                               dtype=jnp.float32)
        return mixture_w, est_mask, norm_coef, w

    key = jax.random.PRNGKey(0)
    k1, k2 = jax.random.split(key)

    # 1) Base config (N not 128-aligned -> merged-mask in-kernel slice path), f32.
    B, K, N, L, nspk = 2, 16, 32, 16, 2
    mix, mask, norm, w = make_inputs(k1, B, K, N, L, nspk)
    ref = decoder_reference(mix, mask, norm, w)
    out = jax.block_until_ready(decoder_forward(mix, mask, norm, w))
    assert out.shape == (B, nspk, K, L), out.shape
    assert jnp.allclose(out, ref, atol=1e-4, rtol=1e-4), \
        float(jnp.max(jnp.abs(out - ref)))

    # 2) Explicit multi-K-tile grid path.
    out_t = jax.block_until_ready(
        decoder_forward(mix, mask, norm, w, max_rows_per_step=8))
    assert jnp.allclose(out_t, ref, atol=1e-4, rtol=1e-4), \
        float(jnp.max(jnp.abs(out_t - ref)))

    # 3) 128-aligned N -> per-speaker DMA-extraction path (no in-kernel relayout).
    B2, K2, N2, L2 = 2, 16, 128, 24
    mix2, mask2, norm2, w2 = make_inputs(k2, B2, K2, N2, L2, nspk)
    ref2 = decoder_reference(mix2, mask2, norm2, w2)
    out2 = jax.block_until_ready(decoder_forward(mix2, mask2, norm2, w2))
    assert out2.shape == (B2, nspk, K2, L2), out2.shape
    assert jnp.allclose(out2, ref2, atol=1e-4, rtol=1e-4), \
        float(jnp.max(jnp.abs(out2 - ref2)))

    # 4) Caller-provided bf16 activations (cast happens upstream in the producer,
    #    NOT in this wrapper): kernel streams bf16, accumulates in f32.
    out_bf16 = jax.block_until_ready(
        decoder_forward(mix.astype(jnp.bfloat16), mask.astype(jnp.bfloat16),
                        norm, w))
    assert jnp.allclose(out_bf16.astype(jnp.float32), ref, atol=1e-1, rtol=1e-1), \
        float(jnp.max(jnp.abs(out_bf16.astype(jnp.float32) - ref)))

    print("KERNEL_OK")
</pallas_src>

<mosaic_0001>
module attributes {stable_mosaic.version = 11 : i64} {
  func.func @_decoder_kernel(%arg0: i32, %arg1: i32, %arg2: memref<1x8x32xf32, #tpu.memory_space<vmem>>, %arg3: memref<1x8x64xf32, #tpu.memory_space<vmem>>, %arg4: memref<1x8x1xf32, #tpu.memory_space<vmem>>, %arg5: memref<32x16xf32, #tpu.memory_space<vmem>>, %arg6: memref<1x2x8x16xf32, #tpu.memory_space<vmem>>) attributes {dimension_semantics = [#tpu.dimension_semantics<parallel>, #tpu.dimension_semantics<parallel>], iteration_bounds = array<i64: 2, 2>, scalar_prefetch = 0 : i64, scratch_operands = 0 : i64, tpu.core_type = #tpu.core_type<tc>, window_params = [{transform_indices = @transform_0, window_bounds = array<i64: 1, 8, 32>}, {transform_indices = @transform_1, window_bounds = array<i64: 1, 8, 64>}, {transform_indices = @transform_2, window_bounds = array<i64: 1, 8, 1>}, {pipeline_mode = #tpu.pipeline_mode<synchronous>, transform_indices = @transform_3, window_bounds = array<i64: 32, 16>}, {transform_indices = @transform_4, window_bounds = array<i64: 1, 2, 8, 16>}]} {
    %c0 = arith.constant 0 : index
    %c0_0 = arith.constant 0 : index
    %c0_1 = arith.constant 0 : index
    %0 = vector.load %arg2[%c0, %c0_0, %c0_1] : memref<1x8x32xf32, #tpu.memory_space<vmem>>, vector<1x8x32xf32>
    %1 = vector.shape_cast %0 : vector<1x8x32xf32> to vector<8x32xf32>
    %c0_2 = arith.constant 0 : index
    %c0_3 = arith.constant 0 : index
    %2 = vector.load %arg5[%c0_2, %c0_3] : memref<32x16xf32, #tpu.memory_space<vmem>>, vector<32x16xf32>
    %c0_4 = arith.constant 0 : index
    %c0_5 = arith.constant 0 : index
    %c0_6 = arith.constant 0 : index
    %3 = vector.load %arg4[%c0_4, %c0_5, %c0_6] : memref<1x8x1xf32, #tpu.memory_space<vmem>>, vector<1x8x1xf32>
    %4 = vector.shape_cast %3 : vector<1x8x1xf32> to vector<8x1xf32>
    %5 = vector.shape_cast %4 : vector<8x1xf32> to vector<8x1xf32>
    %6 = vector.broadcast %5 : vector<8x1xf32> to vector<8x16xf32>
    %c0_7 = arith.constant 0 : index
    %c0_8 = arith.constant 0 : index
    %c0_9 = arith.constant 0 : index
    %7 = vector.load %arg3[%c0_7, %c0_8, %c0_9] : memref<1x8x64xf32, #tpu.memory_space<vmem>>, vector<1x8x32xf32>
    %8 = vector.shape_cast %7 : vector<1x8x32xf32> to vector<8x32xf32>
    %9 = arith.mulf %1, %8 : vector<8x32xf32>
    %cst = arith.constant dense<0.000000e+00> : vector<8x16xf32>
    %10 = tpu.matmul %9, %2, %cst {dimension_numbers = #tpu.dot_dimension_numbers<[1], [0], [0], [1], [0, 0, 1, 1], [], []>} : vector<8x32xf32>, vector<32x16xf32>, vector<8x16xf32> -> vector<8x16xf32>
    %11 = arith.mulf %10, %6 : vector<8x16xf32>
    %c0_10 = arith.constant 0 : index
    %c0_11 = arith.constant 0 : index
    %c0_12 = arith.constant 0 : index
    %c0_13 = arith.constant 0 : index
    %12 = vector.load %arg6[%c0_10, %c0_11, %c0_12, %c0_13] : memref<1x2x8x16xf32, #tpu.memory_space<vmem>>, vector<1x1x8x16xf32>
    %13 = vector.shape_cast %12 : vector<1x1x8x16xf32> to vector<8x16xf32>
    %14 = vector.shape_cast %11 : vector<8x16xf32> to vector<1x1x8x16xf32>
    tpu.vector_store %arg6[%c0_10, %c0_11, %c0_12, %c0_13], %14 {strides = array<i32>} : memref<1x2x8x16xf32, #tpu.memory_space<vmem>>, vector<1x1x8x16xf32>,
    %c0_14 = arith.constant 0 : index
    %c0_15 = arith.constant 0 : index
    %c32 = arith.constant 32 : index
    %15 = vector.load %arg3[%c0_14, %c0_15, %c32] : memref<1x8x64xf32, #tpu.memory_space<vmem>>, vector<1x8x32xf32>
    %16 = vector.shape_cast %15 : vector<1x8x32xf32> to vector<8x32xf32>
    %17 = arith.mulf %1, %16 : vector<8x32xf32>
    %cst_16 = arith.constant dense<0.000000e+00> : vector<8x16xf32>
    %18 = tpu.matmul %17, %2, %cst_16 {dimension_numbers = #tpu.dot_dimension_numbers<[1], [0], [0], [1], [0, 0, 1, 1], [], []>} : vector<8x32xf32>, vector<32x16xf32>, vector<8x16xf32> -> vector<8x16xf32>
    %19 = arith.mulf %18, %6 : vector<8x16xf32>
    %c0_17 = arith.constant 0 : index
    %c1 = arith.constant 1 : index
    %c0_18 = arith.constant 0 : index
    %c0_19 = arith.constant 0 : index
    %20 = vector.load %arg6[%c0_17, %c1, %c0_18, %c0_19] : memref<1x2x8x16xf32, #tpu.memory_space<vmem>>, vector<1x1x8x16xf32>
    %21 = vector.shape_cast %20 : vector<1x1x8x16xf32> to vector<8x16xf32>
    %22 = vector.shape_cast %19 : vector<8x16xf32> to vector<1x1x8x16xf32>
    tpu.vector_store %arg6[%c0_17, %c1, %c0_18, %c0_19], %22 {strides = array<i32>} : memref<1x2x8x16xf32, #tpu.memory_space<vmem>>, vector<1x1x8x16xf32>,
    return
  }
  func.func @transform_0(%arg0: i32, %arg1: i32) -> (i32, i32, i32) {
    %c0_i32 = arith.constant 0 : i32
    %c0_i32_0 = arith.constant 0 : i32
    return %arg0, %arg1, %c0_i32 : i32, i32, i32
  }
  func.func @transform_1(%arg0: i32, %arg1: i32) -> (i32, i32, i32) {
    %c0_i32 = arith.constant 0 : i32
    %c0_i32_0 = arith.constant 0 : i32
    return %arg0, %arg1, %c0_i32 : i32, i32, i32
  }
  func.func @transform_2(%arg0: i32, %arg1: i32) -> (i32, i32, i32) {
    %c0_i32 = arith.constant 0 : i32
    %c0_i32_0 = arith.constant 0 : i32
    return %arg0, %arg1, %c0_i32 : i32, i32, i32
  }
  func.func @transform_3(%arg0: i32, %arg1: i32) -> (i32, i32) {
    %c0_i32 = arith.constant 0 : i32
    %c0_i32_0 = arith.constant 0 : i32
    %c0_i32_1 = arith.constant 0 : i32
    return %c0_i32, %c0_i32_0 : i32, i32
  }
  func.func @transform_4(%arg0: i32, %arg1: i32) -> (i32, i32, i32, i32) {
    %c0_i32 = arith.constant 0 : i32
    %c0_i32_0 = arith.constant 0 : i32
    %c0_i32_1 = arith.constant 0 : i32
    return %arg0, %c0_i32, %arg1, %c0_i32_0 : i32, i32, i32, i32
  }
}

</mosaic_0001>

<llo_original>
// kernel: tpu_custom_call.1
$region0: #{tpu_custom_call.1}
  #allocation0 [shape = 'u32[]', space=smem, size = 0x4, offset = 0x4, fixed_abs, tag = 'smem constant byte address 0x4 - core index']
  #allocation1 [shape = 'u32[144,128]{1,0:T(1,128)}', space=vmem, size = 0x12000, scoped, tag = 'internal scratch']
  %s0 = inlined_call_operand.vmem [shape: f32[2,16,32], index: 0, kind: input, shape index: {}]
  %s1 = inlined_call_operand.vmem [shape: f32[2,16,64], index: 1, kind: input, shape index: {}]
  %s2 = inlined_call_operand.vmem [shape: f32[2,16,1], index: 2, kind: input, shape index: {}]
  %s3 = inlined_call_operand.vmem [shape: f32[32,16], index: 3, kind: input, shape index: {}]
  %s4 = inlined_call_operand.hbm [shape: f32[2,2,16,16], index: 4, kind: output, shape index: {}]
  %s5 = sld [smem:[#allocation0]]
  $region49: #{tpu_custom_call.1} parent=0
    _
  %s7 = ssub.s32 1, %s5
  %s8 = scalar_select 0, %s7, %s5
  $region1: #{tpu_custom_call.1} parent=0
    #allocation2 [shape = 'u8[16384]{0}', space=vmem, size = 0x4000, scoped, tag = 'output window, operand 0']
    #allocation3 [shape = 's32[2]{0}', space=sflag, size = 0x8, scoped, tag = 'scoped memory for tpu_custom_call.1']
    %9 = vsyncpa [#allocation3], 0
    %s10 = scalar_lea.sflag [#allocation3], 1
    %11 = vsyncpa %s10, 0
    loop: start=0, step=1, limit=6
    $region2: #{tpu_custom_call.1} parent=1 // loop_pre_header
      _
    $region3: #{tpu_custom_call.1} parent=1 // loop_header
      %s13 = sphi 0, %s17
      %p14 = scmp.ge.s32.totalorder %s13, 6
      %s20 = sphi 0, %s32
      %s21 = sphi 0, %s28
      %s22 = sphi 0, %s20
      %s23 = sphi 0, %s21
      %s24 = sphi 0, %s22
      %s25 = sphi 0, %s23
      %s37 = sphi 0, %s39
      %s40 = sphi 0, %s37
      %s41 = sphi 0, %s40
      %s57 = sphi 0, %s41
      %s65 = sphi 0, %s67
      %s68 = sphi 0, %s65
      %s69 = sphi 0, %s68
      %s85 = sphi 0, %s69
      %s93 = sphi 0, %s95
      %s96 = sphi 0, %s93
      %s97 = sphi 0, %s96
      %s113 = sphi 0, %s97
      %s117 = sphi 0, %s117
      %s119 = sphi 0, %s117
      %s120 = sphi 0, %s119
      %s134 = sphi 0, %s120
      %s142 = sphi 0, %s144
      %s145 = sphi 0, %s142
      %s146 = sphi 0, %s145
      %s162 = sphi 0, %s146
    $region4: #{tpu_custom_call.1} parent=1 // loop_header_branch
      %16 = sbr.rel (%p14) target = $region8
    $region5: #{tpu_custom_call.1} parent=1 // loop_body
      %s18 = ssub.s32 %s13, 1
      %s19 = ssub.s32 %s13, 2
      %s26 = sadd.s32 1, %s21
      %p27 = scmp.ge.s32.totalorder %s26, 2
      %s28 = scalar_select %p27, 0, %s26
      %s29 = sadd.s32 1, %s20
      %s30 = scalar_select %p27, %s29, %s20
      %p31 = scmp.ge.s32.totalorder %s30, 2
      %s32 = scalar_select %p31, 0, %s30
      %s33 = ssub.s32 %s20, %s32
      %s34 = ssub.s32 %s21, %s28
      %s35 = sor.u32 %s33, %s34
      %p36 = scmp.eq.s32.totalorder %s35, 0
      %s38 = sadd.s32 %s37, 1
      %s39 = scalar_select %p36, %s37, %s38
      %p42 = pneg %p36
      %p43 = scmp.eq.s32.totalorder %s13, 3
      %p44 = por %p42, %p43
      %p45 = scmp.ne.s32.totalorder %s37, %s40
      %p46 = scmp.eq.s32.totalorder %s13, 0
      %p47 = por %p45, %p46
      %p48 = scmp.ne.s32.totalorder %s37, %s40
      %p49 = scmp.eq.s32.totalorder %s18, 3
      %p50 = por %p48, %p49
      %p51 = scmp.ne.s32.totalorder %s40, %s41
      %p52 = scmp.eq.s32.totalorder %s18, 0
      %p53 = por %p51, %p52
      %p54 = scmp.ne.s32.totalorder %s40, %s41
      %p55 = scmp.eq.s32.totalorder %s19, 3
      %p56 = por %p54, %p55
      %p58 = scmp.ne.s32.totalorder %s41, %s57
      %p59 = scmp.eq.s32.totalorder %s19, 0
      %p60 = por %p58, %p59
      %s61 = ssub.s32 %s20, %s32
      %s62 = ssub.s32 %s21, %s28
      %s63 = sor.u32 %s61, %s62
      %p64 = scmp.eq.s32.totalorder %s63, 0
      %s66 = sadd.s32 %s65, 1
      %s67 = scalar_select %p64, %s65, %s66
      %p70 = pneg %p64
      %p71 = scmp.eq.s32.totalorder %s13, 3
      %p72 = por %p70, %p71
      %p73 = scmp.ne.s32.totalorder %s65, %s68
      %p74 = scmp.eq.s32.totalorder %s13, 0
      %p75 = por %p73, %p74
      %p76 = scmp.ne.s32.totalorder %s65, %s68
      %p77 = scmp.eq.s32.totalorder %s18, 3
      %p78 = por %p76, %p77
      %p79 = scmp.ne.s32.totalorder %s68, %s69
      %p80 = scmp.eq.s32.totalorder %s18, 0
      %p81 = por %p79, %p80
      %p82 = scmp.ne.s32.totalorder %s68, %s69
      %p83 = scmp.eq.s32.totalorder %s19, 3
      %p84 = por %p82, %p83
      %p86 = scmp.ne.s32.totalorder %s69, %s85
      %p87 = scmp.eq.s32.totalorder %s19, 0
      %p88 = por %p86, %p87
      %s89 = ssub.s32 %s20, %s32
      %s90 = ssub.s32 %s21, %s28
      %s91 = sor.u32 %s89, %s90
      %p92 = scmp.eq.s32.totalorder %s91, 0
      %s94 = sadd.s32 %s93, 1
      %s95 = scalar_select %p92, %s93, %s94
      %p98 = pneg %p92
      %p99 = scmp.eq.s32.totalorder %s13, 3
      %p100 = por %p98, %p99
      %p101 = scmp.ne.s32.totalorder %s93, %s96
      %p102 = scmp.eq.s32.totalorder %s13, 0
      %p103 = por %p101, %p102
      %p104 = scmp.ne.s32.totalorder %s93, %s96
      %p105 = scmp.eq.s32.totalorder %s18, 3
      %p106 = por %p104, %p105
      %p107 = scmp.ne.s32.totalorder %s96, %s97
      %p108 = scmp.eq.s32.totalorder %s18, 0
      %p109 = por %p107, %p108
      %p110 = scmp.ne.s32.totalorder %s96, %s97
      %p111 = scmp.eq.s32.totalorder %s19, 3
      %p112 = por %p110, %p111
      %p114 = scmp.ne.s32.totalorder %s97, %s113
      %p115 = scmp.eq.s32.totalorder %s19, 0
      %p116 = por %p114, %p115
      %s118 = sadd.s32 %s117, 1
      %p121 = scmp.eq.s32.totalorder %s13, 3
      %p122 = scmp.ne.s32.totalorder %s117, %s119
      %p123 = scmp.eq.s32.totalorder %s13, 0
      %p124 = por %p122, %p123
      %p125 = scmp.ne.s32.totalorder %s117, %s119
      %p126 = scmp.eq.s32.totalorder %s18, 3
      %p127 = por %p125, %p126
      %p128 = scmp.ne.s32.totalorder %s119, %s120
      %p129 = scmp.eq.s32.totalorder %s18, 0
      %p130 = por %p128, %p129
      %p131 = scmp.ne.s32.totalorder %s119, %s120
      %p132 = scmp.eq.s32.totalorder %s19, 3
      %p133 = por %p131, %p132
      %p135 = scmp.ne.s32.totalorder %s120, %s134
      %p136 = scmp.eq.s32.totalorder %s19, 0
      %p137 = por %p135, %p136
      %s138 = ssub.s32 %s20, %s32
      %s139 = ssub.s32 %s21, %s28
      %s140 = sor.u32 %s138, %s139
      %p141 = scmp.eq.s32.totalorder %s140, 0
      %s143 = sadd.s32 %s142, 1
      %s144 = scalar_select %p141, %s142, %s143
      %p147 = pneg %p141
      %p148 = scmp.eq.s32.totalorder %s13, 3
      %p149 = por %p147, %p148
      %p150 = scmp.ne.s32.totalorder %s142, %s145
      %p151 = scmp.eq.s32.totalorder %s13, 0
      %p152 = por %p150, %p151
      %p153 = scmp.ne.s32.totalorder %s142, %s145
      %p154 = scmp.eq.s32.totalorder %s18, 3
      %p155 = por %p153, %p154
      %p156 = scmp.ne.s32.totalorder %s145, %s146
      %p157 = scmp.eq.s32.totalorder %s18, 0
      %p158 = por %p156, %p157
      %p159 = scmp.ne.s32.totalorder %s145, %s146
      %p160 = scmp.eq.s32.totalorder %s19, 3
      %p161 = por %p159, %p160
      %p163 = scmp.ne.s32.totalorder %s146, %s162
      %p164 = scmp.eq.s32.totalorder %s19, 0
      %p165 = por %p163, %p164
      %p166 = scmp.le.s32.totalorder 1, %s13
      %p167 = scmp.lt.s32.totalorder %s13, 5
      %p168 = pnand %p166, %p167
      %p169 = pneg %p168
      // Predicated region
      $region9: #{tpu_custom_call.1} parent=5 // pred_check
        _
      $region10: #{tpu_custom_call.1} parent=5 // pred_check_branch
        %171 = sbr.rel (%p168) target = $region12
      $region11: #{tpu_custom_call.1} parent=5 // pred_region
        %s172 = ssub.s32 %s13, 1
        // Predicated region
        $region13: #{tpu_custom_call.1} parent=11 // pred_check
          %p173 = pneg %p130
        $region14: #{tpu_custom_call.1} parent=11 // pred_check_branch
          %175 = sbr.rel (%p173) target = $region16
        $region15: #{tpu_custom_call.1} parent=11 // pred_region
          _
        $region16: #{tpu_custom_call.1} parent=11 // pred_fallthru
          _
      $region12: #{tpu_custom_call.1} parent=5 // pred_fallthru
        _
      %p176 = scmp.lt.s32.totalorder %s13, 4
      // Predicated region
      $region17: #{tpu_custom_call.1} parent=5 // pred_check
        %p177 = pneg %p176
      $region18: #{tpu_custom_call.1} parent=5 // pred_check_branch
        %179 = sbr.rel (%p177) target = $region20
      $region19: #{tpu_custom_call.1} parent=5 // pred_region
        // Predicated region
        $region21: #{tpu_custom_call.1} parent=19 // pred_check
          %p180 = pneg %p47
        $region22: #{tpu_custom_call.1} parent=19 // pred_check_branch
          %182 = sbr.rel (%p180) target = $region24
        $region23: #{tpu_custom_call.1} parent=19 // pred_region
          %p183 = scmp.lt.s32.totalorder %s20, 1
          %s184 = scalar_select %p183, %s20, 1
          %p185 = scmp.lt.s32.totalorder %s21, 1
          %s186 = scalar_select %p185, %s21, 1
          %s187 = smul.addr %s184, 2
          %s188 = sadd.s32 %s186, %s187
          %s189 = smul.addr %s188, 8
          %s190 = scalar_lea.vmem %s0, %s189
        $region24: #{tpu_custom_call.1} parent=19 // pred_fallthru
          _
        // Predicated region
        $region25: #{tpu_custom_call.1} parent=19 // pred_check
          %p191 = pneg %p75
        $region26: #{tpu_custom_call.1} parent=19 // pred_check_branch
          %193 = sbr.rel (%p191) target = $region28
        $region27: #{tpu_custom_call.1} parent=19 // pred_region
          %p194 = scmp.lt.s32.totalorder %s20, 1
          %s195 = scalar_select %p194, %s20, 1
          %p196 = scmp.lt.s32.totalorder %s21, 1
          %s197 = scalar_select %p196, %s21, 1
          %s198 = smul.addr %s195, 2
          %s199 = sadd.s32 %s197, %s198
          %s200 = smul.addr %s199, 8
          %s201 = scalar_lea.vmem %s1, %s200
        $region28: #{tpu_custom_call.1} parent=19 // pred_fallthru
          _
        // Predicated region
        $region29: #{tpu_custom_call.1} parent=19 // pred_check
          %p202 = pneg %p103
        $region30: #{tpu_custom_call.1} parent=19 // pred_check_branch
          %204 = sbr.rel (%p202) target = $region32
        $region31: #{tpu_custom_call.1} parent=19 // pred_region
          %p205 = scmp.lt.s32.totalorder %s20, 1
          %s206 = scalar_select %p205, %s20, 1
          %p207 = scmp.lt.s32.totalorder %s21, 1
          %s208 = scalar_select %p207, %s21, 1
          %s209 = smul.addr %s206, 2
          %s210 = sadd.s32 %s208, %s209
          %s211 = smul.addr %s210, 8
          %s212 = scalar_lea.vmem %s2, %s211
        $region32: #{tpu_custom_call.1} parent=19 // pred_fallthru
          _
      $region20: #{tpu_custom_call.1} parent=5 // pred_fallthru
        _
      %p213 = scmp.le.s32.totalorder 1, %s13
      %p214 = scmp.lt.s32.totalorder %s13, 5
      %p215 = pnand %p213, %p214
      %p216 = pneg %p215
      // Predicated region
      $region33: #{tpu_custom_call.1} parent=5 // pred_check
        _
      $region34: #{tpu_custom_call.1} parent=5 // pred_check_branch
        %218 = sbr.rel (%p215) target = $region36
      $region35: #{tpu_custom_call.1} parent=5 // pred_region
        %s219 = ssub.s32 %s13, 1
        %p220 = scmp.lt.s32.totalorder %s22, 1
        %s221 = scalar_select %p220, %s22, 1
        %p222 = scmp.lt.s32.totalorder %s23, 1
        %s223 = scalar_select %p222, %s23, 1
        %s224 = smul.addr %s221, 2
        %s225 = sadd.s32 %s223, %s224
        %s226 = smul.addr %s225, 8
        %s227 = scalar_lea.vmem %s0, %s226
        %p228 = pneg %p53
        %p229 = pneg %p50
        %p230 = scmp.lt.s32.totalorder %s22, 1
        %s231 = scalar_select %p230, %s22, 1
        %p232 = scmp.lt.s32.totalorder %s23, 1
        %s233 = scalar_select %p232, %s23, 1
        %s234 = smul.addr %s231, 2
        %s235 = sadd.s32 %s233, %s234
        %s236 = smul.addr %s235, 8
        %s237 = scalar_lea.vmem %s1, %s236
        %p238 = pneg %p81
        %p239 = pneg %p78
        %p240 = scmp.lt.s32.totalorder %s22, 1
        %s241 = scalar_select %p240, %s22, 1
        %p242 = scmp.lt.s32.totalorder %s23, 1
        %s243 = scalar_select %p242, %s23, 1
        %s244 = smul.addr %s241, 2
        %s245 = sadd.s32 %s243, %s244
        %s246 = smul.addr %s245, 8
        %s247 = scalar_lea.vmem %s2, %s246
        %p248 = pneg %p109
        %p249 = pneg %p106
        %p250 = pneg %p130
        %p251 = pneg %p127
        %p252 = pneg %p158
        %p253 = pneg %p155
        %s254 = sand.u32 %s145, 1
        %s255 = scalar_lea.sflag [#allocation3], %s254
        %s256 = sand.u32 %s145, 1
        %s257 = smul.addr %s256, 16
        %s258 = scalar_lea.vmem [#allocation2], %s257
        %p259 = scmp.lt.s32.totalorder %s22, 1
        %s260 = scalar_select %p259, %s22, 1
        %p261 = scmp.lt.s32.totalorder %s23, 1
        %s262 = scalar_select %p261, %s23, 1
        %s263 = smul.addr %s260, 2
        %s264 = sadd.s32 %s262, %s263
        %s265 = smul.addr %s264, 8
        %s266 = scalar_lea.vmem %s0, %s265
        %p267 = scmp.lt.s32.totalorder %s22, 1
        %s268 = scalar_select %p267, %s22, 1
        %p269 = scmp.lt.s32.totalorder %s23, 1
        %s270 = scalar_select %p269, %s23, 1
        %s271 = smul.addr %s268, 2
        %s272 = sadd.s32 %s270, %s271
        %s273 = smul.addr %s272, 8
        %s274 = scalar_lea.vmem %s1, %s273
        %p275 = scmp.lt.s32.totalorder %s22, 1
        %s276 = scalar_select %p275, %s22, 1
        %p277 = scmp.lt.s32.totalorder %s23, 1
        %s278 = scalar_select %p277, %s23, 1
        %s279 = smul.addr %s276, 2
        %s280 = sadd.s32 %s278, %s279
        %s281 = smul.addr %s280, 8
        %s282 = scalar_lea.vmem %s2, %s281
        %v283 = vld [vmem:[%s266] sm:$0xff]
        %v284 = vld [vmem:[%s3] sm:$0xff]
        %v285 = vld [vmem:[%s3 + $0x8] sm:$0xff]
        %v286 = vld [vmem:[%s3 + $0x10] sm:$0xff]
        %v287 = vld [vmem:[%s3 + $0x18] sm:$0xff]
        %v288 = vld [vmem:[%s282] sm:$0xff]
        %290 = vset.pattern.permute.xlu0 0
        %291 = vperm.xlu0 %290, %v288
        %v292 = vpop.permute.xlu0 %291
        %v294 = vld [vmem:[%s274] sm:$0xff]
        %v295 = vmul.f32 %v283, %v294
        %vm296 = vcmask 261120
        %v298 = vsel %vm296, %v295, 0
        %300 = vmatprep.subr.mxu0 0.0
        %301 = vmatpush1.msra.mxu0 %v284
        %302 = vmatprep.subr.mxu0 0.0
        %303 = vmatpush1.msra.mxu0 %v285
        %304 = vmatprep.subr.mxu0 0.0
        %305 = vmatpush1.msra.mxu0 %v286
        %306 = vmatprep.subr.mxu0 0.0
        %307 = vmatpush1.msra.mxu0 %v287
        %308 = vmatprep.subr.mxu0 0.0
        %309 = vmatpush1.msra.mxu0 0.0
        %310 = vmatprep.subr.mxu0 0.0
        %311 = vmatpush1.msra.mxu0 0.0
        %312 = vmatprep.subr.mxu0 0.0
        %313 = vmatpush1.msra.mxu0 0.0
        %314 = vmatprep.subr.mxu0 0.0
        %315 = vmatpush1.msra.mxu0 0.0
        %316 = vmatprep.subr.mxu0 0.0
        %317 = vmatpush1.msra.mxu0 0.0
        %318 = vmatprep.subr.mxu0 0.0
        %319 = vmatpush1.msra.mxu0 0.0
        %320 = vmatprep.subr.mxu0 0.0
        %321 = vmatpush1.msra.mxu0 0.0
        %322 = vmatprep.subr.mxu0 0.0
        %323 = vmatpush1.msra.mxu0 0.0
        %324 = vmatprep.subr.mxu0 0.0
        %325 = vmatpush1.msra.mxu0 0.0
        %326 = vmatprep.subr.mxu0 0.0
        %327 = vmatpush1.msra.mxu0 0.0
        %328 = vmatprep.subr.mxu0 0.0
        %329 = vmatpush1.msra.mxu0 0.0
        %330 = vmatprep.subr.mxu0 0.0
        %331 = vmatpush1.msra.mxu0 0.0
        %332 = vmatprep.subr.mxu0 0.0
        %333 = vmatpush1.msra.mxu0 0.0
        %334 = vmatprep.subr.mxu0 0.0
        %335 = vmatpush1.msra.mxu0 0.0
        %336 = vmatprep.subr.mxu0 0.0
        %337 = vmatpush1.msra.mxu0 0.0
        %338 = vmatprep.subr.mxu0 0.0
        %339 = vmatpush1.msra.mxu0 0.0
        %340 = vmatprep.subr.mxu0 0.0
        %341 = vmatpush1.msra.mxu0 0.0
        %342 = vmatprep.subr.mxu0 0.0
        %343 = vmatpush1.msra.mxu0 0.0
        %344 = vmatprep.subr.mxu0 0.0
        %345 = vmatpush1.msra.mxu0 0.0
        %346 = vmatprep.subr.mxu0 0.0
        %347 = vmatpush1.msra.mxu0 0.0
        %348 = vmatprep.subr.mxu0 0.0
        %349 = vmatpush1.msra.mxu0 0.0
        %350 = vmatprep.subr.mxu0 0.0
        %351 = vmatpush1.msra.mxu0 0.0
        %352 = vmatprep.subr.mxu0 0.0
        %353 = vmatpush1.msra.mxu0 0.0
        %354 = vmatprep.subr.mxu0 0.0
        %355 = vmatpush1.msra.mxu0 0.0
        %356 = vmatprep.subr.mxu0 0.0
        %357 = vmatpush1.msra.mxu0 0.0
        %358 = vmatprep.subr.mxu0 0.0
        %359 = vmatpush1.msra.mxu0 0.0
        %360 = vmatprep.subr.mxu0 0.0
        %361 = vmatpush1.msra.mxu0 0.0
        %362 = vmatprep.subr.mxu0 0.0
        %363 = vmatpush1.msra.mxu0 0.0
        %364 = vmatprep.mubr.f32.mxu0 0.0
        %365 = vmatmul.mubr.f32.gmra.mrb[0].mxu0 %v298
        %v366 = vpop.f32.mrb[0].mxu0
        %v367 = vadd.f32 0.0, %v366
        %v368 = vpop.f32.mrb[0].mxu0
        %369 = vdwg.mxu0
        %v370 = vmul.f32 %v367, %v292
        %vm371 = vcmask 130048
        %372 = vst.msk [vmem:[%s258] sm:$0xff] %vm371, %v370
        %v373 = vld [vmem:[%s274] sm:$0xff]
        %375 = vrot.lane.b32.xlu0 %v373, 96
        %v376 = vpop.permute.xlu0 %375
        %v378 = vmul.f32 %v283, %v376
        %v380 = vsel %vm296, %v378, 0
        %382 = vmatprep.subr.mxu0 0.0
        %383 = vmatpush1.msra.mxu0 %v284
        %384 = vmatprep.subr.mxu0 0.0
        %385 = vmatpush1.msra.mxu0 %v285
        %386 = vmatprep.subr.mxu0 0.0
        %387 = vmatpush1.msra.mxu0 %v286
        %388 = vmatprep.subr.mxu0 0.0
        %389 = vmatpush1.msra.mxu0 %v287
        %390 = vmatprep.subr.mxu0 0.0
        %391 = vmatpush1.msra.mxu0 0.0
        %392 = vmatprep.subr.mxu0 0.0
        %393 = vmatpush1.msra.mxu0 0.0
        %394 = vmatprep.subr.mxu0 0.0
        %395 = vmatpush1.msra.mxu0 0.0
        %396 = vmatprep.subr.mxu0 0.0
        %397 = vmatpush1.msra.mxu0 0.0
        %398 = vmatprep.subr.mxu0 0.0
        %399 = vmatpush1.msra.mxu0 0.0
        %400 = vmatprep.subr.mxu0 0.0
        %401 = vmatpush1.msra.mxu0 0.0
        %402 = vmatprep.subr.mxu0 0.0
        %403 = vmatpush1.msra.mxu0 0.0
        %404 = vmatprep.subr.mxu0 0.0
        %405 = vmatpush1.msra.mxu0 0.0
        %406 = vmatprep.subr.mxu0 0.0
        %407 = vmatpush1.msra.mxu0 0.0
        %408 = vmatprep.subr.mxu0 0.0
        %409 = vmatpush1.msra.mxu0 0.0
        %410 = vmatprep.subr.mxu0 0.0
        %411 = vmatpush1.msra.mxu0 0.0
        %412 = vmatprep.subr.mxu0 0.0
        %413 = vmatpush1.msra.mxu0 0.0
        %414 = vmatprep.subr.mxu0 0.0
        %415 = vmatpush1.msra.mxu0 0.0
        %416 = vmatprep.subr.mxu0 0.0
        %417 = vmatpush1.msra.mxu0 0.0
        %418 = vmatprep.subr.mxu0 0.0
        %419 = vmatpush1.msra.mxu0 0.0
        %420 = vmatprep.subr.mxu0 0.0
        %421 = vmatpush1.msra.mxu0 0.0
        %422 = vmatprep.subr.mxu0 0.0
        %423 = vmatpush1.msra.mxu0 0.0
        %424 = vmatprep.subr.mxu0 0.0
        %425 = vmatpush1.msra.mxu0 0.0
        %426 = vmatprep.subr.mxu0 0.0
        %427 = vmatpush1.msra.mxu0 0.0
        %428 = vmatprep.subr.mxu0 0.0
        %429 = vmatpush1.msra.mxu0 0.0
        %430 = vmatprep.subr.mxu0 0.0
        %431 = vmatpush1.msra.mxu0 0.0
        %432 = vmatprep.subr.mxu0 0.0
        %433 = vmatpush1.msra.mxu0 0.0
        %434 = vmatprep.subr.mxu0 0.0
        %435 = vmatpush1.msra.mxu0 0.0
        %436 = vmatprep.subr.mxu0 0.0
        %437 = vmatpush1.msra.mxu0 0.0
        %438 = vmatprep.subr.mxu0 0.0
        %439 = vmatpush1.msra.mxu0 0.0
        %440 = vmatprep.subr.mxu0 0.0
        %441 = vmatpush1.msra.mxu0 0.0
        %442 = vmatprep.subr.mxu0 0.0
        %443 = vmatpush1.msra.mxu0 0.0
        %444 = vmatprep.subr.mxu0 0.0
        %445 = vmatpush1.msra.mxu0 0.0
        %446 = vmatprep.mubr.f32.mxu0 0.0
        %447 = vmatmul.mubr.f32.gmra.mrb[0].mxu0 %v380
        %v448 = vpop.f32.mrb[0].mxu0
        %v449 = vadd.f32 0.0, %v448
        %v450 = vpop.f32.mrb[0].mxu0
        %451 = vdwg.mxu0
        %v452 = vmul.f32 %v449, %v292
        %s453 = scalar_lea.vmem %s258, 8 [#allocation2]
        %454 = vst.msk [vmem:[%s453] sm:$0xff] %vm371, %v452
        %s455 = sand.u32 %s145, 1
        %s456 = scalar_lea.sflag [#allocation3], %s455
        %s457 = sand.u32 %s145, 1
        %s458 = smul.addr %s457, 16
        %s459 = scalar_lea.vmem [#allocation2], %s458
        // Predicated region
        $region37: #{tpu_custom_call.1} parent=35 // pred_check
          %p460 = pneg %p155
        $region38: #{tpu_custom_call.1} parent=35 // pred_check_branch
          %462 = sbr.rel (%p460) target = $region40
        $region39: #{tpu_custom_call.1} parent=35 // pred_region
          %s464 = ssub.s32 256, 256
          %465 = vsyncadd %s456, %s464
          %s466 = smul.addr %s22, 4
          %s467 = sadd.s32 %s23, %s466
          %s468 = smul.addr %s467, 128
          %s469 = scalar_lea.hbm %s4, %s468
          %s470 = sshll.u32 %s459, 4
          %s471 = int_to_ptr.vmem [resolvable:$true] %s470
          %476 = dma.vmem_to_hbm [thread:$0]  %s471, 256, %s469, %s456, 128, 256, 8
        $region40: #{tpu_custom_call.1} parent=35 // pred_fallthru
          _
      $region36: #{tpu_custom_call.1} parent=5 // pred_fallthru
        _
      %p477 = scmp.le.s32.totalorder 2, %s13
      // Predicated region
      $region41: #{tpu_custom_call.1} parent=5 // pred_check
        %p478 = pneg %p477
      $region42: #{tpu_custom_call.1} parent=5 // pred_check_branch
        %480 = sbr.rel (%p478) target = $region44
      $region43: #{tpu_custom_call.1} parent=5 // pred_region
        %s481 = ssub.s32 %s13, 2
        // Predicated region
        $region45: #{tpu_custom_call.1} parent=43 // pred_check
          %p482 = pneg %p161
        $region46: #{tpu_custom_call.1} parent=43 // pred_check_branch
          %484 = sbr.rel (%p482) target = $region48
        $region47: #{tpu_custom_call.1} parent=43 // pred_region
          %s485 = sand.u32 %s146, 1
          %s486 = scalar_lea.sflag [#allocation3], %s485
          %s487 = sand.u32 %s146, 1
          %s488 = smul.addr %s487, 16
          %s489 = scalar_lea.vmem [#allocation2], %s488
          %490 = dma.done %s486, 256
        $region48: #{tpu_custom_call.1} parent=43 // pred_fallthru
          _
      $region44: #{tpu_custom_call.1} parent=5 // pred_fallthru
        _
    $region6: #{tpu_custom_call.1} parent=1 // loop_footer
      %s17 = sadd.s32 1, %s13
    $region7: #{tpu_custom_call.1} parent=1 // loop_footer_branch
      %12 = sbr.rel target = $region3
    $region8: #{tpu_custom_call.1} parent=1 // loop_exit
      _
    %491 = vsyncpa [#allocation3], 1
    %s492 = scalar_lea.sflag [#allocation3], 1
    %493 = vsyncpa %s492, 1

</llo_original>
